<compile_context>
chip_gen: v5e
topology: v5e:2x2
jax: 0.10.0
libtpu: 0.0.40
codegen_flags: <defaults>
</compile_context>

<pallas_src>
import jax
import jax.numpy as jnp
from jax.experimental import pallas as pl
from jax.experimental.pallas import tpu as pltpu


def _mlp_kernel(xT_ref, w1_ref, b1_ref, w2_ref, b2_ref, w3_ref, b3_ref, o_ref):
    xT = xT_ref[...]                                                     # (F, T)

    # Layer 1: folded(Linear(9,64) + BatchNorm1d(64)) + ReLU   (dropout = identity)
    h1 = jnp.dot(w1_ref[...], xT, preferred_element_type=jnp.float32) + b1_ref[...]
    h1 = jnp.maximum(h1, 0.0)                                            # (64, T)

    # Layer 2: folded(Linear(64,32) + BatchNorm1d(32)) + ReLU  (dropout = identity)
    h2 = jnp.dot(w2_ref[...], h1, preferred_element_type=jnp.float32) + b2_ref[...]
    h2 = jnp.maximum(h2, 0.0)                                            # (32, T)

    # Layer 3: Linear(32,1) + ReLU  -> lane-dense (1, T) output slab
    out = jnp.dot(w3_ref[...], h2, preferred_element_type=jnp.float32) + b3_ref[...]
    o_ref[...] = jnp.maximum(out, 0.0)                                   # (1, T)


def insurance_model_forward(x, params, *, batch_tile=512):
    """Eval-mode forward. x: [N, 9] float32 -> [N, 1] float32.

    params are in PyTorch layout: w[out,in], b[out], plus folded BN scale/shift
    vectors per BN layer.
    """
    (w1, b1, s1, t1, w2, b2, s2, t2, w3, b3) = params
    N, F = x.shape
    H1, H2, O = w1.shape[0], w2.shape[0], w3.shape[0]

    # Fold BatchNorm (eval-mode running stats) into the Linear weights/biases.
    w1f = w1 * s1[:, None]                  # (64, 9)
    b1f = (s1 * b1 + t1)[:, None]           # (64, 1)
    w2f = w2 * s2[:, None]                  # (32, 64)
    b2f = (s2 * b2 + t2)[:, None]           # (32, 1)
    w3f = w3                                # (1, 32)
    b3f = b3[:, None]                       # (1, 1)

    # Lane-aligned batch tiling; pad N up so any batch size works.
    assert batch_tile % 128 == 0, "batch_tile must be a multiple of 128"
    n_tiles = pl.cdiv(N, batch_tile)
    Np = n_tiles * batch_tile
    xT = jnp.pad(x.T, ((0, 0), (0, Np - N)))            # (F, Np), batch on lanes

    def rep(shape):
        # Resident weight / bias blocks: same full block at every grid step.
        return pl.BlockSpec(shape, lambda i: (0, 0))

    outT = pl.pallas_call(
        _mlp_kernel,
        out_shape=jax.ShapeDtypeStruct((O, Np), jnp.float32),
        grid_spec=pltpu.PrefetchScalarGridSpec(
            num_scalar_prefetch=0,
            grid=(n_tiles,),
            in_specs=[
                pl.BlockSpec((F, batch_tile), lambda i: (0, i)),   # x tile (F, T)
                rep((H1, F)), rep((H1, 1)),
                rep((H2, H1)), rep((H2, 1)),
                rep((O, H2)), rep((O, 1)),
            ],
            out_specs=pl.BlockSpec((O, batch_tile), lambda i: (0, i)),
        ),
        compiler_params=pltpu.CompilerParams(
            dimension_semantics=("parallel",)),
    )(xT, w1f, b1f, w2f, b2f, w3f, b3f)

    return outT[:, :N].T                    # (N, 1)


def make_params(key, input_size=9):
    """Deterministic synthetic parameters, PyTorch layouts (w[out,in], b[out])."""
    ks = jax.random.split(key, 14)
    w1 = jax.random.normal(ks[0], (64, input_size), jnp.float32) * 0.1
    b1 = jax.random.normal(ks[1], (64,), jnp.float32) * 0.1
    w2 = jax.random.normal(ks[2], (32, 64), jnp.float32) * 0.1
    b2 = jax.random.normal(ks[3], (32,), jnp.float32) * 0.1
    w3 = jax.random.normal(ks[4], (1, 32), jnp.float32) * 0.1
    b3 = jax.random.normal(ks[5], (1,), jnp.float32) * 0.1

    eps = 1e-5

    def bn_fold(dim, kg, kb, km, kv):
        gamma = 1.0 + 0.1 * jax.random.normal(kg, (dim,), jnp.float32)
        beta = 0.1 * jax.random.normal(kb, (dim,), jnp.float32)
        running_mean = 0.1 * jax.random.normal(km, (dim,), jnp.float32)
        running_var = 0.5 + jax.random.uniform(kv, (dim,), jnp.float32)
        scale = gamma / jnp.sqrt(running_var + eps)
        shift = beta - running_mean * scale
        return scale, shift

    s1, t1 = bn_fold(64, ks[6], ks[7], ks[8], ks[9])
    s2, t2 = bn_fold(32, ks[10], ks[11], ks[12], ks[13])
    return (w1, b1, s1, t1, w2, b2, s2, t2, w3, b3)


def reference_forward(x, params):
    """Pure-JAX reference in the original (unfolded, row-major) formulation."""
    (w1, b1, s1, t1, w2, b2, s2, t2, w3, b3) = params
    h1 = jnp.maximum((x @ w1.T + b1) * s1 + t1, 0.0)
    h2 = jnp.maximum((h1 @ w2.T + b2) * s2 + t2, 0.0)
    return jnp.maximum(h2 @ w3.T + b3, 0.0)


if __name__ == "__main__":
    key = jax.random.PRNGKey(0)
    k_x, k_p = jax.random.split(key)

    N, F = 300, 9  # non-multiple of the tile: exercises the pad/slice path
    x = jax.random.normal(k_x, (N, F), jnp.float32)
    params = make_params(k_p, input_size=F)

    out = insurance_model_forward(x, params, batch_tile=128)
    out = jax.block_until_ready(out)

    ref = reference_forward(x, params)
    assert out.shape == (N, 1), out.shape
    assert jnp.allclose(out, ref, atol=1e-4, rtol=1e-4), "mismatch vs reference"

    print("KERNEL_OK")
</pallas_src>

<mosaic_0001>
module attributes {stable_mosaic.version = 11 : i64} {
  func.func @_mlp_kernel(%arg0: i32, %arg1: memref<9x128xf32, #tpu.memory_space<vmem>>, %arg2: memref<64x9xf32, #tpu.memory_space<vmem>>, %arg3: memref<64x1xf32, #tpu.memory_space<vmem>>, %arg4: memref<32x64xf32, #tpu.memory_space<vmem>>, %arg5: memref<32x1xf32, #tpu.memory_space<vmem>>, %arg6: memref<1x32xf32, #tpu.memory_space<vmem>>, %arg7: memref<1x1xf32, #tpu.memory_space<vmem>>, %arg8: memref<1x128xf32, #tpu.memory_space<vmem>>) attributes {dimension_semantics = [#tpu.dimension_semantics<parallel>], iteration_bounds = array<i64: 3>, scalar_prefetch = 0 : i64, scratch_operands = 0 : i64, tpu.core_type = #tpu.core_type<tc>, window_params = [{transform_indices = @transform_0, window_bounds = array<i64: 9, 128>}, {pipeline_mode = #tpu.pipeline_mode<synchronous>, transform_indices = @transform_1, window_bounds = array<i64: 64, 9>}, {pipeline_mode = #tpu.pipeline_mode<synchronous>, transform_indices = @transform_2, window_bounds = array<i64: 64, 1>}, {pipeline_mode = #tpu.pipeline_mode<synchronous>, transform_indices = @transform_3, window_bounds = array<i64: 32, 64>}, {pipeline_mode = #tpu.pipeline_mode<synchronous>, transform_indices = @transform_4, window_bounds = array<i64: 32, 1>}, {pipeline_mode = #tpu.pipeline_mode<synchronous>, transform_indices = @transform_5, window_bounds = array<i64: 1, 32>}, {pipeline_mode = #tpu.pipeline_mode<synchronous>, transform_indices = @transform_6, window_bounds = array<i64: 1, 1>}, {transform_indices = @transform_7, window_bounds = array<i64: 1, 128>}]} {
    %c0 = arith.constant 0 : index
    %c0_0 = arith.constant 0 : index
    %0 = vector.load %arg1[%c0, %c0_0] : memref<9x128xf32, #tpu.memory_space<vmem>>, vector<9x128xf32>
    %c0_1 = arith.constant 0 : index
    %c0_2 = arith.constant 0 : index
    %1 = vector.load %arg2[%c0_1, %c0_2] : memref<64x9xf32, #tpu.memory_space<vmem>>, vector<64x9xf32>
    %cst = arith.constant dense<0.000000e+00> : vector<64x128xf32>
    %2 = tpu.matmul %1, %0, %cst {dimension_numbers = #tpu.dot_dimension_numbers<[1], [0], [0], [1], [0, 0, 1, 1], [], []>} : vector<64x9xf32>, vector<9x128xf32>, vector<64x128xf32> -> vector<64x128xf32>
    %c0_3 = arith.constant 0 : index
    %c0_4 = arith.constant 0 : index
    %3 = vector.load %arg3[%c0_3, %c0_4] : memref<64x1xf32, #tpu.memory_space<vmem>>, vector<64x1xf32>
    %4 = vector.broadcast %3 : vector<64x1xf32> to vector<64x128xf32>
    %5 = arith.addf %2, %4 : vector<64x128xf32>
    %cst_5 = arith.constant 0.000000e+00 : f32
    %6 = vector.broadcast %cst_5 : f32 to vector<64x128xf32>
    %7 = arith.maximumf %5, %6 : vector<64x128xf32>
    %c0_6 = arith.constant 0 : index
    %c0_7 = arith.constant 0 : index
    %8 = vector.load %arg4[%c0_6, %c0_7] : memref<32x64xf32, #tpu.memory_space<vmem>>, vector<32x64xf32>
    %cst_8 = arith.constant dense<0.000000e+00> : vector<32x128xf32>
    %9 = tpu.matmul %8, %7, %cst_8 {dimension_numbers = #tpu.dot_dimension_numbers<[1], [0], [0], [1], [0, 0, 1, 1], [], []>} : vector<32x64xf32>, vector<64x128xf32>, vector<32x128xf32> -> vector<32x128xf32>
    %c0_9 = arith.constant 0 : index
    %c0_10 = arith.constant 0 : index
    %10 = vector.load %arg5[%c0_9, %c0_10] : memref<32x1xf32, #tpu.memory_space<vmem>>, vector<32x1xf32>
    %11 = vector.broadcast %10 : vector<32x1xf32> to vector<32x128xf32>
    %12 = arith.addf %9, %11 : vector<32x128xf32>
    %cst_11 = arith.constant 0.000000e+00 : f32
    %13 = vector.broadcast %cst_11 : f32 to vector<32x128xf32>
    %14 = arith.maximumf %12, %13 : vector<32x128xf32>
    %c0_12 = arith.constant 0 : index
    %c0_13 = arith.constant 0 : index
    %15 = vector.load %arg6[%c0_12, %c0_13] : memref<1x32xf32, #tpu.memory_space<vmem>>, vector<1x32xf32>
    %cst_14 = arith.constant dense<0.000000e+00> : vector<1x128xf32>
    %16 = tpu.matmul %15, %14, %cst_14 {dimension_numbers = #tpu.dot_dimension_numbers<[1], [0], [0], [1], [0, 0, 1, 1], [], []>} : vector<1x32xf32>, vector<32x128xf32>, vector<1x128xf32> -> vector<1x128xf32>
    %c0_15 = arith.constant 0 : index
    %c0_16 = arith.constant 0 : index
    %17 = vector.load %arg7[%c0_15, %c0_16] : memref<1x1xf32, #tpu.memory_space<vmem>>, vector<1x1xf32>
    %18 = vector.broadcast %17 : vector<1x1xf32> to vector<1x128xf32>
    %19 = arith.addf %16, %18 : vector<1x128xf32>
    %cst_17 = arith.constant 0.000000e+00 : f32
    %20 = vector.broadcast %cst_17 : f32 to vector<1x128xf32>
    %21 = arith.maximumf %19, %20 : vector<1x128xf32>
    %c0_18 = arith.constant 0 : index
    %c0_19 = arith.constant 0 : index
    %22 = vector.load %arg8[%c0_18, %c0_19] : memref<1x128xf32, #tpu.memory_space<vmem>>, vector<1x128xf32>
    tpu.vector_store %arg8[%c0_18, %c0_19], %21 {strides = array<i32>} : memref<1x128xf32, #tpu.memory_space<vmem>>, vector<1x128xf32>,
    return
  }
  func.func @transform_0(%arg0: i32) -> (i32, i32) {
    %c0_i32 = arith.constant 0 : i32
    %c0_i32_0 = arith.constant 0 : i32
    return %c0_i32, %arg0 : i32, i32
  }
  func.func @transform_1(%arg0: i32) -> (i32, i32) {
    %c0_i32 = arith.constant 0 : i32
    %c0_i32_0 = arith.constant 0 : i32
    %c0_i32_1 = arith.constant 0 : i32
    return %c0_i32, %c0_i32_0 : i32, i32
  }
  func.func @transform_2(%arg0: i32) -> (i32, i32) {
    %c0_i32 = arith.constant 0 : i32
    %c0_i32_0 = arith.constant 0 : i32
    %c0_i32_1 = arith.constant 0 : i32
    return %c0_i32, %c0_i32_0 : i32, i32
  }
  func.func @transform_3(%arg0: i32) -> (i32, i32) {
    %c0_i32 = arith.constant 0 : i32
    %c0_i32_0 = arith.constant 0 : i32
    %c0_i32_1 = arith.constant 0 : i32
    return %c0_i32, %c0_i32_0 : i32, i32
  }
  func.func @transform_4(%arg0: i32) -> (i32, i32) {
    %c0_i32 = arith.constant 0 : i32
    %c0_i32_0 = arith.constant 0 : i32
    %c0_i32_1 = arith.constant 0 : i32
    return %c0_i32, %c0_i32_0 : i32, i32
  }
  func.func @transform_5(%arg0: i32) -> (i32, i32) {
    %c0_i32 = arith.constant 0 : i32
    %c0_i32_0 = arith.constant 0 : i32
    %c0_i32_1 = arith.constant 0 : i32
    return %c0_i32, %c0_i32_0 : i32, i32
  }
  func.func @transform_6(%arg0: i32) -> (i32, i32) {
    %c0_i32 = arith.constant 0 : i32
    %c0_i32_0 = arith.constant 0 : i32
    %c0_i32_1 = arith.constant 0 : i32
    return %c0_i32, %c0_i32_0 : i32, i32
  }
  func.func @transform_7(%arg0: i32) -> (i32, i32) {
    %c0_i32 = arith.constant 0 : i32
    %c0_i32_0 = arith.constant 0 : i32
    return %c0_i32, %arg0 : i32, i32
  }
}

</mosaic_0001>

<llo_original>
// kernel: tpu_custom_call.1
$region0: #{tpu_custom_call.1}
  #allocation0 [shape = 'u32[]', space=smem, size = 0x4, offset = 0x4, fixed_abs, tag = 'smem constant byte address 0x4 - core index']
  #allocation1 [shape = 'u32[72,128]{1,0:T(1,128)}', space=vmem, size = 0x9000, scoped, tag = 'internal scratch']
  #allocation2 [shape = 'f32[1,1]{1,0:T(1,128)S(1)}', space=vmem, size = 0x200, scoped, tag = 'scoped memory for tpu_custom_call.1']
  %s0 = inlined_call_operand.vmem [shape: f32[9,384], index: 0, kind: input, shape index: {}]
  %s1 = inlined_call_operand.vmem [shape: f32[64,9], index: 1, kind: input, shape index: {}]
  %s2 = inlined_call_operand.vmem [shape: f32[64,1], index: 2, kind: input, shape index: {}]
  %s3 = inlined_call_operand.vmem [shape: f32[32,64], index: 3, kind: input, shape index: {}]
  %s4 = inlined_call_operand.vmem [shape: f32[32,1], index: 4, kind: input, shape index: {}]
  %s5 = inlined_call_operand.vmem [shape: f32[1,32], index: 5, kind: input, shape index: {}]
  %s6 = inlined_call_operand.<no memory space> [shape: f32[1,1], index: 6, kind: input, shape index: {}]
  %s7 = inlined_call_operand.hbm [shape: f32[1,384], index: 7, kind: output, shape index: {}]
  %s8 = sld [smem:[#allocation0]]
  $region99: #{tpu_custom_call.1} parent=0
    _
  %s10 = ssub.s32 1, %s8
  %s11 = scalar_select 0, %s10, %s8
  %v12 = vstv %s6
  %13 = vst [vmem:[#allocation2] sm:$0x1] %v12
  $region1: #{tpu_custom_call.1} parent=0
    #allocation3 [shape = 'u8[16384]{0}', space=vmem, size = 0x4000, scoped, tag = 'input window, operand 0']
    #allocation4 [shape = 'u8[1024]{0}', space=vmem, size = 0x400, scoped, tag = 'output window, operand 0']
    #allocation5 [shape = 's32[2]{0}', space=sflag, size = 0x8, scoped, tag = 'scoped memory for tpu_custom_call.1']
    %14 = vsyncpa [#allocation5], 0
    %s15 = scalar_lea.sflag [#allocation5], 1
    %16 = vsyncpa %s15, 0
    loop: start=0, step=1, limit=5
    $region2: #{tpu_custom_call.1} parent=1 // loop_pre_header
      _
    $region3: #{tpu_custom_call.1} parent=1 // loop_header
      %s18 = sphi 0, %s22
      %p19 = scmp.ge.s32.totalorder %s18, 5
      %s28 = sphi 0, %s30
      %s31 = sphi 0, %s28
      %s32 = sphi 0, %s31
      %s48 = sphi 0, %s32
      %s52 = sphi 0, %s52
      %s54 = sphi 0, %s52
      %s55 = sphi 0, %s54
      %s69 = sphi 0, %s55
      %s73 = sphi 0, %s73
      %s75 = sphi 0, %s73
      %s76 = sphi 0, %s75
      %s90 = sphi 0, %s76
      %s94 = sphi 0, %s94
      %s96 = sphi 0, %s94
      %s97 = sphi 0, %s96
      %s111 = sphi 0, %s97
      %s115 = sphi 0, %s115
      %s117 = sphi 0, %s115
      %s118 = sphi 0, %s117
      %s132 = sphi 0, %s118
      %s136 = sphi 0, %s136
      %s138 = sphi 0, %s136
      %s139 = sphi 0, %s138
      %s153 = sphi 0, %s139
      %s157 = sphi 0, %s157
      %s159 = sphi 0, %s157
      %s160 = sphi 0, %s159
      %s174 = sphi 0, %s160
      %s180 = sphi 0, %s182
      %s183 = sphi 0, %s180
      %s184 = sphi 0, %s183
      %s200 = sphi 0, %s184
    $region4: #{tpu_custom_call.1} parent=1 // loop_header_branch
      %21 = sbr.rel (%p19) target = $region8
    $region5: #{tpu_custom_call.1} parent=1 // loop_body
      %s23 = ssub.s32 %s18, 1
      %s24 = ssub.s32 %s18, 2
      %s25 = sadd.s32 %s18, 1
      %s26 = ssub.s32 %s18, %s25
      %p27 = scmp.eq.s32.totalorder %s26, 0
      %s29 = sadd.s32 %s28, 1
      %s30 = scalar_select %p27, %s28, %s29
      %p33 = pneg %p27
      %p34 = scmp.eq.s32.totalorder %s18, 2
      %p35 = por %p33, %p34
      %p36 = scmp.ne.s32.totalorder %s28, %s31
      %p37 = scmp.eq.s32.totalorder %s18, 0
      %p38 = por %p36, %p37
      %p39 = scmp.ne.s32.totalorder %s28, %s31
      %p40 = scmp.eq.s32.totalorder %s23, 2
      %p41 = por %p39, %p40
      %p42 = scmp.ne.s32.totalorder %s31, %s32
      %p43 = scmp.eq.s32.totalorder %s23, 0
      %p44 = por %p42, %p43
      %p45 = scmp.ne.s32.totalorder %s31, %s32
      %p46 = scmp.eq.s32.totalorder %s24, 2
      %p47 = por %p45, %p46
      %p49 = scmp.ne.s32.totalorder %s32, %s48
      %p50 = scmp.eq.s32.totalorder %s24, 0
      %p51 = por %p49, %p50
      %s53 = sadd.s32 %s52, 1
      %p56 = scmp.eq.s32.totalorder %s18, 2
      %p57 = scmp.ne.s32.totalorder %s52, %s54
      %p58 = scmp.eq.s32.totalorder %s18, 0
      %p59 = por %p57, %p58
      %p60 = scmp.ne.s32.totalorder %s52, %s54
      %p61 = scmp.eq.s32.totalorder %s23, 2
      %p62 = por %p60, %p61
      %p63 = scmp.ne.s32.totalorder %s54, %s55
      %p64 = scmp.eq.s32.totalorder %s23, 0
      %p65 = por %p63, %p64
      %p66 = scmp.ne.s32.totalorder %s54, %s55
      %p67 = scmp.eq.s32.totalorder %s24, 2
      %p68 = por %p66, %p67
      %p70 = scmp.ne.s32.totalorder %s55, %s69
      %p71 = scmp.eq.s32.totalorder %s24, 0
      %p72 = por %p70, %p71
      %s74 = sadd.s32 %s73, 1
      %p77 = scmp.eq.s32.totalorder %s18, 2
      %p78 = scmp.ne.s32.totalorder %s73, %s75
      %p79 = scmp.eq.s32.totalorder %s18, 0
      %p80 = por %p78, %p79
      %p81 = scmp.ne.s32.totalorder %s73, %s75
      %p82 = scmp.eq.s32.totalorder %s23, 2
      %p83 = por %p81, %p82
      %p84 = scmp.ne.s32.totalorder %s75, %s76
      %p85 = scmp.eq.s32.totalorder %s23, 0
      %p86 = por %p84, %p85
      %p87 = scmp.ne.s32.totalorder %s75, %s76
      %p88 = scmp.eq.s32.totalorder %s24, 2
      %p89 = por %p87, %p88
      %p91 = scmp.ne.s32.totalorder %s76, %s90
      %p92 = scmp.eq.s32.totalorder %s24, 0
      %p93 = por %p91, %p92
      %s95 = sadd.s32 %s94, 1
      %p98 = scmp.eq.s32.totalorder %s18, 2
      %p99 = scmp.ne.s32.totalorder %s94, %s96
      %p100 = scmp.eq.s32.totalorder %s18, 0
      %p101 = por %p99, %p100
      %p102 = scmp.ne.s32.totalorder %s94, %s96
      %p103 = scmp.eq.s32.totalorder %s23, 2
      %p104 = por %p102, %p103
      %p105 = scmp.ne.s32.totalorder %s96, %s97
      %p106 = scmp.eq.s32.totalorder %s23, 0
      %p107 = por %p105, %p106
      %p108 = scmp.ne.s32.totalorder %s96, %s97
      %p109 = scmp.eq.s32.totalorder %s24, 2
      %p110 = por %p108, %p109
      %p112 = scmp.ne.s32.totalorder %s97, %s111
      %p113 = scmp.eq.s32.totalorder %s24, 0
      %p114 = por %p112, %p113
      %s116 = sadd.s32 %s115, 1
      %p119 = scmp.eq.s32.totalorder %s18, 2
      %p120 = scmp.ne.s32.totalorder %s115, %s117
      %p121 = scmp.eq.s32.totalorder %s18, 0
      %p122 = por %p120, %p121
      %p123 = scmp.ne.s32.totalorder %s115, %s117
      %p124 = scmp.eq.s32.totalorder %s23, 2
      %p125 = por %p123, %p124
      %p126 = scmp.ne.s32.totalorder %s117, %s118
      %p127 = scmp.eq.s32.totalorder %s23, 0
      %p128 = por %p126, %p127
      %p129 = scmp.ne.s32.totalorder %s117, %s118
      %p130 = scmp.eq.s32.totalorder %s24, 2
      %p131 = por %p129, %p130
      %p133 = scmp.ne.s32.totalorder %s118, %s132
      %p134 = scmp.eq.s32.totalorder %s24, 0
      %p135 = por %p133, %p134
      %s137 = sadd.s32 %s136, 1
      %p140 = scmp.eq.s32.totalorder %s18, 2
      %p141 = scmp.ne.s32.totalorder %s136, %s138
      %p142 = scmp.eq.s32.totalorder %s18, 0
      %p143 = por %p141, %p142
      %p144 = scmp.ne.s32.totalorder %s136, %s138
      %p145 = scmp.eq.s32.totalorder %s23, 2
      %p146 = por %p144, %p145
      %p147 = scmp.ne.s32.totalorder %s138, %s139
      %p148 = scmp.eq.s32.totalorder %s23, 0
      %p149 = por %p147, %p148
      %p150 = scmp.ne.s32.totalorder %s138, %s139
      %p151 = scmp.eq.s32.totalorder %s24, 2
      %p152 = por %p150, %p151
      %p154 = scmp.ne.s32.totalorder %s139, %s153
      %p155 = scmp.eq.s32.totalorder %s24, 0
      %p156 = por %p154, %p155
      %s158 = sadd.s32 %s157, 1
      %p161 = scmp.eq.s32.totalorder %s18, 2
      %p162 = scmp.ne.s32.totalorder %s157, %s159
      %p163 = scmp.eq.s32.totalorder %s18, 0
      %p164 = por %p162, %p163
      %p165 = scmp.ne.s32.totalorder %s157, %s159
      %p166 = scmp.eq.s32.totalorder %s23, 2
      %p167 = por %p165, %p166
      %p168 = scmp.ne.s32.totalorder %s159, %s160
      %p169 = scmp.eq.s32.totalorder %s23, 0
      %p170 = por %p168, %p169
      %p171 = scmp.ne.s32.totalorder %s159, %s160
      %p172 = scmp.eq.s32.totalorder %s24, 2
      %p173 = por %p171, %p172
      %p175 = scmp.ne.s32.totalorder %s160, %s174
      %p176 = scmp.eq.s32.totalorder %s24, 0
      %p177 = por %p175, %p176
      %s178 = ssub.s32 %s18, %s25
      %p179 = scmp.eq.s32.totalorder %s178, 0
      %s181 = sadd.s32 %s180, 1
      %s182 = scalar_select %p179, %s180, %s181
      %p185 = pneg %p179
      %p186 = scmp.eq.s32.totalorder %s18, 2
      %p187 = por %p185, %p186
      %p188 = scmp.ne.s32.totalorder %s180, %s183
      %p189 = scmp.eq.s32.totalorder %s18, 0
      %p190 = por %p188, %p189
      %p191 = scmp.ne.s32.totalorder %s180, %s183
      %p192 = scmp.eq.s32.totalorder %s23, 2
      %p193 = por %p191, %p192
      %p194 = scmp.ne.s32.totalorder %s183, %s184
      %p195 = scmp.eq.s32.totalorder %s23, 0
      %p196 = por %p194, %p195
      %p197 = scmp.ne.s32.totalorder %s183, %s184
      %p198 = scmp.eq.s32.totalorder %s24, 2
      %p199 = por %p197, %p198
      %p201 = scmp.ne.s32.totalorder %s184, %s200
      %p202 = scmp.eq.s32.totalorder %s24, 0
      %p203 = por %p201, %p202
      %p204 = scmp.le.s32.totalorder 1, %s18
      %p205 = scmp.lt.s32.totalorder %s18, 4
      %p206 = pnand %p204, %p205
      %p207 = pneg %p206
      // Predicated region
      $region9: #{tpu_custom_call.1} parent=5 // pred_check
        _
      $region10: #{tpu_custom_call.1} parent=5 // pred_check_branch
        %209 = sbr.rel (%p206) target = $region12
      $region11: #{tpu_custom_call.1} parent=5 // pred_region
        %s210 = ssub.s32 %s18, 1
        // Predicated region
        $region13: #{tpu_custom_call.1} parent=11 // pred_check
          %p211 = pneg %p65
        $region14: #{tpu_custom_call.1} parent=11 // pred_check_branch
          %213 = sbr.rel (%p211) target = $region16
        $region15: #{tpu_custom_call.1} parent=11 // pred_region
          _
        $region16: #{tpu_custom_call.1} parent=11 // pred_fallthru
          _
        // Predicated region
        $region17: #{tpu_custom_call.1} parent=11 // pred_check
          %p214 = pneg %p86
        $region18: #{tpu_custom_call.1} parent=11 // pred_check_branch
          %216 = sbr.rel (%p214) target = $region20
        $region19: #{tpu_custom_call.1} parent=11 // pred_region
          _
        $region20: #{tpu_custom_call.1} parent=11 // pred_fallthru
          _
        // Predicated region
        $region21: #{tpu_custom_call.1} parent=11 // pred_check
          %p217 = pneg %p107
        $region22: #{tpu_custom_call.1} parent=11 // pred_check_branch
          %219 = sbr.rel (%p217) target = $region24
        $region23: #{tpu_custom_call.1} parent=11 // pred_region
          _
        $region24: #{tpu_custom_call.1} parent=11 // pred_fallthru
          _
        // Predicated region
        $region25: #{tpu_custom_call.1} parent=11 // pred_check
          %p220 = pneg %p128
        $region26: #{tpu_custom_call.1} parent=11 // pred_check_branch
          %222 = sbr.rel (%p220) target = $region28
        $region27: #{tpu_custom_call.1} parent=11 // pred_region
          _
        $region28: #{tpu_custom_call.1} parent=11 // pred_fallthru
          _
        // Predicated region
        $region29: #{tpu_custom_call.1} parent=11 // pred_check
          %p223 = pneg %p149
        $region30: #{tpu_custom_call.1} parent=11 // pred_check_branch
          %225 = sbr.rel (%p223) target = $region32
        $region31: #{tpu_custom_call.1} parent=11 // pred_region
          _
        $region32: #{tpu_custom_call.1} parent=11 // pred_fallthru
          _
        // Predicated region
        $region33: #{tpu_custom_call.1} parent=11 // pred_check
          %p226 = pneg %p170
        $region34: #{tpu_custom_call.1} parent=11 // pred_check_branch
          %228 = sbr.rel (%p226) target = $region36
        $region35: #{tpu_custom_call.1} parent=11 // pred_region
          _
        $region36: #{tpu_custom_call.1} parent=11 // pred_fallthru
          _
      $region12: #{tpu_custom_call.1} parent=5 // pred_fallthru
        _
      %p229 = scmp.lt.s32.totalorder %s18, 3
      // Predicated region
      $region37: #{tpu_custom_call.1} parent=5 // pred_check
        %p230 = pneg %p229
      $region38: #{tpu_custom_call.1} parent=5 // pred_check_branch
        %232 = sbr.rel (%p230) target = $region40
      $region39: #{tpu_custom_call.1} parent=5 // pred_region
        // Predicated region
        $region41: #{tpu_custom_call.1} parent=39 // pred_check
          %p233 = pneg %p38
        $region42: #{tpu_custom_call.1} parent=39 // pred_check_branch
          %235 = sbr.rel (%p233) target = $region44
        $region43: #{tpu_custom_call.1} parent=39 // pred_region
          %s236 = sand.u32 %s28, 1
          %s237 = sand.u32 %s28, 1
          %s238 = smul.addr %s237, 16
          %s239 = scalar_lea.vmem [#allocation3], %s238
          %s240 = smul.addr %s18, 8
          %s241 = scalar_lea.vmem %s0, %s240
          // Predicated region
          $region45: #{tpu_custom_call.1} parent=43 // pred_check
            _
          $region46: #{tpu_custom_call.1} parent=43 // pred_check_branch
            %243 = sbr.rel (0) target = $region48
          $region47: #{tpu_custom_call.1} parent=43 // pred_region
            // Predicated region
            $region49: #{tpu_custom_call.1} parent=47 // pred_check
              _
            $region50: #{tpu_custom_call.1} parent=47 // pred_check_branch
              %245 = sbr.rel (0) target = $region52
            $region51: #{tpu_custom_call.1} parent=47 // pred_region
              // Predicated region
              $region64: #{tpu_custom_call.1} parent=51 // pred_check
                _
              $region65: #{tpu_custom_call.1} parent=51 // pred_check_branch
                %263 = sbr.rel (0) target = $region67
              $region66: #{tpu_custom_call.1} parent=51 // pred_region
                loop: start=0, step=1, limit=1
                $region68: #{tpu_custom_call.1} parent=66 // loop_pre_header
                  _
                $region69: #{tpu_custom_call.1} parent=66 // loop_header
                  %s265 = sphi 0, %s269
                  %p266 = scmp.ge.s32.totalorder %s265, 1
                  %s270 = sphi %s241, %s241
                  %s271 = sphi %s239, %s239
                $region70: #{tpu_custom_call.1} parent=66 // loop_header_branch
                  %268 = sbr.rel (%p266) target = $region74
                $region71: #{tpu_custom_call.1} parent=66 // loop_body
                  %v272 = vld [vmem:[%s270] sm:$0xff]
                  %273 = vst [vmem:[%s271] sm:$0xff] %v272
                  %v274 = vld [vmem:[%s270 + $0x18] sm:$0xff]
                  %275 = vst [vmem:[%s271 + $0x8] sm:$0xff] %v274
                $region72: #{tpu_custom_call.1} parent=66 // loop_footer
                  %s269 = sadd.s32 1, %s265
                $region73: #{tpu_custom_call.1} parent=66 // loop_footer_branch
                  %264 = sbr.rel target = $region69
                $region74: #{tpu_custom_call.1} parent=66 // loop_exit
                  _
              $region67: #{tpu_custom_call.1} parent=51 // pred_fallthru
                _
              // Predicated region
              $region75: #{tpu_custom_call.1} parent=51 // pred_check
                _
              $region76: #{tpu_custom_call.1} parent=51 // pred_check_branch
                %277 = sbr.rel target = $region78
              $region77: #{tpu_custom_call.1} parent=51 // pred_region
                _
              $region78: #{tpu_custom_call.1} parent=51 // pred_fallthru
                _
            $region52: #{tpu_custom_call.1} parent=47 // pred_fallthru
              _
            // Predicated region
            $region53: #{tpu_custom_call.1} parent=47 // pred_check
              _
            $region54: #{tpu_custom_call.1} parent=47 // pred_check_branch
              %247 = sbr.rel target = $region56
            $region55: #{tpu_custom_call.1} parent=47 // pred_region
              %s249 = ssub.s32 256, 1
              loop: start=0, step=1, limit=1
              $region57: #{tpu_custom_call.1} parent=55 // loop_pre_header
                _
              $region58: #{tpu_custom_call.1} parent=55 // loop_header
                %s251 = sphi 0, %s255
                %p252 = scmp.ge.s32.totalorder %s251, 1
                %s256 = sphi %s241, %s241
                %s257 = sphi %s239, %s239
              $region59: #{tpu_custom_call.1} parent=55 // loop_header_branch
                %254 = sbr.rel (%p252) target = $region63
              $region60: #{tpu_custom_call.1} parent=55 // loop_body
                %v258 = vld [vmem:[%s256] sm:%s249]
                %259 = vst [vmem:[%s257] sm:%s249] %v258
                %v260 = vld [vmem:[%s256 + $0x18] sm:%s249]
                %261 = vst [vmem:[%s257 + $0x8] sm:%s249] %v260
              $region61: #{tpu_custom_call.1} parent=55 // loop_footer
                %s255 = sadd.s32 1, %s251
              $region62: #{tpu_custom_call.1} parent=55 // loop_footer_branch
                %250 = sbr.rel target = $region58
              $region63: #{tpu_custom_call.1} parent=55 // loop_exit
                _
            $region56: #{tpu_custom_call.1} parent=47 // pred_fallthru
              _
          $region48: #{tpu_custom_call.1} parent=43 // pred_fallthru
            _
          %278 = vnop
        $region44: #{tpu_custom_call.1} parent=39 // pred_fallthru
          _
      $region40: #{tpu_custom_call.1} parent=5 // pred_fallthru
        _
      %p279 = scmp.le.s32.totalorder 1, %s18
      %p280 = scmp.lt.s32.totalorder %s18, 4
      %p281 = pnand %p279, %p280
      %p282 = pneg %p281
      // Predicated region
      $region79: #{tpu_custom_call.1} parent=5 // pred_check
        _
      $region80: #{tpu_custom_call.1} parent=5 // pred_check_branch
        %284 = sbr.rel (%p281) target = $region82
      $region81: #{tpu_custom_call.1} parent=5 // pred_region
        %s285 = ssub.s32 %s18, 1
        %s286 = sand.u32 %s31, 1
        %s287 = sand.u32 %s31, 1
        %s288 = smul.addr %s287, 16
        %s289 = scalar_lea.vmem [#allocation3], %s288
        // Predicated region
        $region83: #{tpu_custom_call.1} parent=81 // pred_check
          %p290 = pneg %p44
        $region84: #{tpu_custom_call.1} parent=81 // pred_check_branch
          %292 = sbr.rel (%p290) target = $region86
        $region85: #{tpu_custom_call.1} parent=81 // pred_region
          _
        $region86: #{tpu_custom_call.1} parent=81 // pred_fallthru
          _
        %s293 = sand.u32 %s31, 1
        %s294 = sand.u32 %s31, 1
        %s295 = smul.addr %s294, 16
        %s296 = scalar_lea.vmem [#allocation3], %s295
        %p297 = pneg %p44
        %p298 = pneg %p41
        %p299 = pneg %p65
        %p300 = pneg %p62
        %p301 = pneg %p86
        %p302 = pneg %p83
        %p303 = pneg %p107
        %p304 = pneg %p104
        %p305 = pneg %p128
        %p306 = pneg %p125
        %p307 = pneg %p149
        %p308 = pneg %p146
        %p309 = pneg %p170
        %p310 = pneg %p167
        %p311 = pneg %p196
        %p312 = pneg %p193
        %s313 = sand.u32 %s183, 1
        %s314 = scalar_lea.sflag [#allocation5], %s313
        %s315 = sand.u32 %s183, 1
        %s316 = scalar_lea.vmem [#allocation4], %s315
        %v317 = vld [vmem:[%s289] sm:$0xff]
        %v318 = vld [vmem:[%s289 + $0x8] sm:$0x1]
        %v319 = vld [vmem:[%s1] sm:$0xff]
        %v320 = vld [vmem:[%s1 + $0x8] sm:$0xff]
        %v321 = vld [vmem:[%s1 + $0x10] sm:$0xff]
        %v322 = vld [vmem:[%s1 + $0x18] sm:$0xff]
        %v323 = vld [vmem:[%s1 + $0x20] sm:$0xff]
        %v324 = vld [vmem:[%s1 + $0x28] sm:$0xff]
        %v325 = vld [vmem:[%s1 + $0x30] sm:$0xff]
        %v326 = vld [vmem:[%s1 + $0x38] sm:$0xff]
        %v327 = vld [vmem:[%s2] sm:$0xff]
        %v328 = vld [vmem:[%s2 + $0x8] sm:$0xff]
        %v329 = vld [vmem:[%s2 + $0x10] sm:$0xff]
        %v330 = vld [vmem:[%s2 + $0x18] sm:$0xff]
        %v331 = vld [vmem:[%s2 + $0x20] sm:$0xff]
        %v332 = vld [vmem:[%s2 + $0x28] sm:$0xff]
        %v333 = vld [vmem:[%s2 + $0x30] sm:$0xff]
        %v334 = vld [vmem:[%s2 + $0x38] sm:$0xff]
        %336 = vset.pattern.permute.xlu0 0
        %337 = vperm.xlu0 %336, %v327
        %v338 = vpop.permute.xlu0 %337
        %341 = vset.pattern.permute.xlu0 0
        %342 = vperm.xlu0 %341, %v328
        %v343 = vpop.permute.xlu0 %342
        %346 = vset.pattern.permute.xlu0 0
        %347 = vperm.xlu0 %346, %v329
        %v348 = vpop.permute.xlu0 %347
        %351 = vset.pattern.permute.xlu0 0
        %352 = vperm.xlu0 %351, %v330
        %v353 = vpop.permute.xlu0 %352
        %356 = vset.pattern.permute.xlu0 0
        %357 = vperm.xlu0 %356, %v331
        %v358 = vpop.permute.xlu0 %357
        %361 = vset.pattern.permute.xlu0 0
        %362 = vperm.xlu0 %361, %v332
        %v363 = vpop.permute.xlu0 %362
        %366 = vset.pattern.permute.xlu0 0
        %367 = vperm.xlu0 %366, %v333
        %v368 = vpop.permute.xlu0 %367
        %371 = vset.pattern.permute.xlu0 0
        %372 = vperm.xlu0 %371, %v334
        %v373 = vpop.permute.xlu0 %372
        %vm375 = vcmask 72704
        %v377 = vsel %vm375, %v319, 0
        %v380 = vsel %vm375, %v320, 0
        %v383 = vsel %vm375, %v321, 0
        %v386 = vsel %vm375, %v322, 0
        %v389 = vsel %vm375, %v323, 0
        %v392 = vsel %vm375, %v324, 0
        %v395 = vsel %vm375, %v325, 0
        %v398 = vsel %vm375, %v326, 0
        %vm400 = vcmask 1040384
        %v402 = vsel %vm400, %v318, 0
        %404 = vmatpush.msra.mxu0 0.0
        %405 = vmatpush.msra.mxu0 0.0
        %406 = vmatpush.msra.mxu0 0.0
        %407 = vmatpush.msra.mxu0 0.0
        %408 = vmatpush.msra.mxu0 0.0
        %409 = vmatpush.msra.mxu0 0.0
        %410 = vmatpush.msra.mxu0 0.0
        %411 = vmatpush.msra.mxu0 0.0
        %412 = vmatpush.msra.mxu0 0.0
        %413 = vmatpush.msra.mxu0 0.0
        %414 = vmatpush.msra.mxu0 0.0
        %415 = vmatpush.msra.mxu0 0.0
        %416 = vmatpush.msra.mxu0 0.0
        %417 = vmatpush.msra.mxu0 0.0
        %418 = vmatpush.msra.mxu0 %v402
        %419 = vmatpush.msra.mxu0 %v317
        %420 = vmatmul.f32.gmra.mxu0 %v377
        %v421 = vpop.f32.mrf.mxu0
        %v422 = vadd.f32 %v338, %v421
        %423 = vmatmul.f32.gmra.mxu0 %v380
        %v424 = vpop.f32.mrf.mxu0
        %v425 = vadd.f32 %v343, %v424
        %426 = vmatmul.f32.gmra.mxu0 %v383
        %v427 = vpop.f32.mrf.mxu0
        %v428 = vadd.f32 %v348, %v427
        %429 = vmatmul.f32.gmra.mxu0 %v386
        %v430 = vpop.f32.mrf.mxu0
        %v431 = vadd.f32 %v353, %v430
        %432 = vmatmul.f32.gmra.mxu0 %v389
        %v433 = vpop.f32.mrf.mxu0
        %v434 = vadd.f32 %v358, %v433
        %435 = vmatmul.f32.gmra.mxu0 %v392
        %v436 = vpop.f32.mrf.mxu0
        %v437 = vadd.f32 %v363, %v436
        %438 = vmatmul.f32.gmra.mxu0 %v395
        %v439 = vpop.f32.mrf.mxu0
        %v440 = vadd.f32 %v368, %v439
        %441 = vmatmul.f32.gmra.mxu0 %v398
        %v442 = vpop.f32.mrf.mxu0
        %v443 = vadd.f32 %v373, %v442
        %444 = vdwg.mxu0
        %v445 = vmax.f32 %v422, 0.0
        %v446 = vmax.f32 %v425, 0.0
        %v447 = vmax.f32 %v428, 0.0
        %v448 = vmax.f32 %v431, 0.0
        %v449 = vmax.f32 %v434, 0.0
        %v450 = vmax.f32 %v437, 0.0
        %v451 = vmax.f32 %v440, 0.0
        %v452 = vmax.f32 %v443, 0.0
        %v453 = vld [vmem:[%s3] sm:$0xff]
        %v454 = vld [vmem:[%s3 + $0x8] sm:$0xff]
        %v455 = vld [vmem:[%s3 + $0x10] sm:$0xff]
        %v456 = vld [vmem:[%s3 + $0x18] sm:$0xff]
        %v457 = vld [vmem:[%s4] sm:$0xff]
        %v458 = vld [vmem:[%s4 + $0x8] sm:$0xff]
        %v459 = vld [vmem:[%s4 + $0x10] sm:$0xff]
        %v460 = vld [vmem:[%s4 + $0x18] sm:$0xff]
        %462 = vset.pattern.permute.xlu0 0
        %463 = vperm.xlu0 %462, %v457
        %v464 = vpop.permute.xlu0 %463
        %467 = vset.pattern.permute.xlu0 0
        %468 = vperm.xlu0 %467, %v458
        %v469 = vpop.permute.xlu0 %468
        %472 = vset.pattern.permute.xlu0 0
        %473 = vperm.xlu0 %472, %v459
        %v474 = vpop.permute.xlu0 %473
        %477 = vset.pattern.permute.xlu0 0
        %478 = vperm.xlu0 %477, %v460
        %v479 = vpop.permute.xlu0 %478
        %vm481 = vcmask 523264
        %v483 = vsel %vm481, %v453, 0
        %v486 = vsel %vm481, %v454, 0
        %v489 = vsel %vm481, %v455, 0
        %v492 = vsel %vm481, %v456, 0
        %494 = vmatpush.msra.mxu0 0.0
        %495 = vmatpush.msra.mxu0 0.0
        %496 = vmatpush.msra.mxu0 0.0
        %497 = vmatpush.msra.mxu0 0.0
        %498 = vmatpush.msra.mxu0 0.0
        %499 = vmatpush.msra.mxu0 0.0
        %500 = vmatpush.msra.mxu0 0.0
        %501 = vmatpush.msra.mxu0 0.0
        %502 = vmatpush.msra.mxu0 %v452
        %503 = vmatpush.msra.mxu0 %v451
        %504 = vmatpush.msra.mxu0 %v450
        %505 = vmatpush.msra.mxu0 %v449
        %506 = vmatpush.msra.mxu0 %v448
        %507 = vmatpush.msra.mxu0 %v447
        %508 = vmatpush.msra.mxu0 %v446
        %509 = vmatpush.msra.mxu0 %v445
        %510 = vmatmul.f32.gmra.mxu0 %v483
        %v511 = vpop.f32.mrf.mxu0
        %v512 = vadd.f32 %v464, %v511
        %513 = vmatmul.f32.gmra.mxu0 %v486
        %v514 = vpop.f32.mrf.mxu0
        %v515 = vadd.f32 %v469, %v514
        %516 = vmatmul.f32.gmra.mxu0 %v489
        %v517 = vpop.f32.mrf.mxu0
        %v518 = vadd.f32 %v474, %v517
        %519 = vmatmul.f32.gmra.mxu0 %v492
        %v520 = vpop.f32.mrf.mxu0
        %v521 = vadd.f32 %v479, %v520
        %522 = vdwg.mxu0
        %v523 = vmax.f32 %v512, 0.0
        %v524 = vmax.f32 %v515, 0.0
        %v525 = vmax.f32 %v518, 0.0
        %v526 = vmax.f32 %v521, 0.0
        %v527 = vld [vmem:[%s5] sm:$0x1]
        %v528 = vld [vmem:[#allocation2] sm:$0x1]
        %530 = vset.pattern.permute.xlu0 0
        %531 = vperm.xlu0 %530, %v528
        %v532 = vpop.permute.xlu0 %531
        %v534 = vperm.slane %v532, 0
        %vm535 = vcmask 261120
        %v537 = vsel %vm535, %v527, 0
        %539 = vmatpush.msra.mxu0 0.0
        %540 = vmatpush.msra.mxu0 0.0
        %541 = vmatpush.msra.mxu0 0.0
        %542 = vmatpush.msra.mxu0 0.0
        %543 = vmatpush.msra.mxu0 0.0
        %544 = vmatpush.msra.mxu0 0.0
        %545 = vmatpush.msra.mxu0 0.0
        %546 = vmatpush.msra.mxu0 0.0
        %547 = vmatpush.msra.mxu0 0.0
        %548 = vmatpush.msra.mxu0 0.0
        %549 = vmatpush.msra.mxu0 0.0
        %550 = vmatpush.msra.mxu0 0.0
        %551 = vmatpush.msra.mxu0 %v526
        %552 = vmatpush.msra.mxu0 %v525
        %553 = vmatpush.msra.mxu0 %v524
        %554 = vmatpush.msra.mxu0 %v523
        %555 = vmatmul.f32.gmra.mxu0 %v537
        %v556 = vpop.f32.mrf.mxu0
        %v557 = vadd.f32 %v534, %v556
        %558 = vdwg.mxu0
        %v559 = vmax.f32 %v557, 0.0
        %560 = vst [vmem:[%s316] sm:$0x1] %v559
        %s561 = sand.u32 %s183, 1
        %s562 = scalar_lea.sflag [#allocation5], %s561
        %s563 = sand.u32 %s183, 1
        %s564 = scalar_lea.vmem [#allocation4], %s563
        // Predicated region
        $region87: #{tpu_custom_call.1} parent=81 // pred_check
          %p565 = pneg %p193
        $region88: #{tpu_custom_call.1} parent=81 // pred_check_branch
          %567 = sbr.rel (%p565) target = $region90
        $region89: #{tpu_custom_call.1} parent=81 // pred_region
          %569 = vsyncadd %s562, 0
          %s570 = scalar_lea.hbm %s7, %s23
          %s572 = sshll.u32 %s564, 4
          %s573 = int_to_ptr.vmem [resolvable:$true] %s572
          %s574 = sshll.u32 %s570, 4
          %s575 = int_to_ptr.hbm [resolvable:$true] %s574
          %577 = dma.vmem_to_hbm [thread:$0]  %s573, 16, %s575, %s562
        $region90: #{tpu_custom_call.1} parent=81 // pred_fallthru
          _
      $region82: #{tpu_custom_call.1} parent=5 // pred_fallthru
        _
      %p578 = scmp.le.s32.totalorder 2, %s18
      // Predicated region
      $region91: #{tpu_custom_call.1} parent=5 // pred_check
        %p579 = pneg %p578
      $region92: #{tpu_custom_call.1} parent=5 // pred_check_branch
        %581 = sbr.rel (%p579) target = $region94
      $region93: #{tpu_custom_call.1} parent=5 // pred_region
        %s582 = ssub.s32 %s18, 2
        // Predicated region
        $region95: #{tpu_custom_call.1} parent=93 // pred_check
          %p583 = pneg %p199
        $region96: #{tpu_custom_call.1} parent=93 // pred_check_branch
          %585 = sbr.rel (%p583) target = $region98
        $region97: #{tpu_custom_call.1} parent=93 // pred_region
          %s586 = sand.u32 %s184, 1
          %s587 = scalar_lea.sflag [#allocation5], %s586
          %s588 = sand.u32 %s184, 1
          %s589 = scalar_lea.vmem [#allocation4], %s588
          %591 = dma.done %s587, 16
        $region98: #{tpu_custom_call.1} parent=93 // pred_fallthru
          _
      $region94: #{tpu_custom_call.1} parent=5 // pred_fallthru
        _
    $region6: #{tpu_custom_call.1} parent=1 // loop_footer
      %s22 = sadd.s32 1, %s18
    $region7: #{tpu_custom_call.1} parent=1 // loop_footer_branch
      %17 = sbr.rel target = $region3
    $region8: #{tpu_custom_call.1} parent=1 // loop_exit
      _
    %592 = vsyncpa [#allocation5], 1
    %s593 = scalar_lea.sflag [#allocation5], 1
    %594 = vsyncpa %s593, 1

</llo_original>
